<compile_context>
chip_gen: v5e
topology: v5e:2x2
jax: 0.10.0
libtpu: 0.0.40
codegen_flags: <defaults>
</compile_context>

<pallas_src>
import math

import jax
import jax.numpy as jnp
from jax.experimental import pallas as pl
from jax.experimental.pallas import tpu as pltpu

N_CLUSTER = 20


def gmm_kernel(x_ref, p_ref, o_ref):
    # x_ref: (2, TN)      points, lane-dense (points on lanes, xy on sublanes)
    # p_ref: (K_pad, 5)   per-component params: [mu0, mu1, 1/sig0, 1/sig1, w]
    #                     padded rows have mu=0, 1/sig=0, w=0 -> contribute 0
    # o_ref: (1, TN)      sqrt(norm * exp(log_prob(x) - max log_prob(mu)))
    x0 = x_ref[0:1, :]          # (1, TN)
    x1 = x_ref[1:2, :]          # (1, TN)
    mu0 = p_ref[:, 0:1]         # (K_pad, 1)
    mu1 = p_ref[:, 1:2]
    inv_s0 = p_ref[:, 2:3]
    inv_s1 = p_ref[:, 3:4]
    w = p_ref[:, 4:5]

    z0 = (x0 - mu0) * inv_s0                      # (K_pad, TN)
    z1 = (x1 - mu1) * inv_s1                      # (K_pad, TN)
    e = w * jnp.exp(-0.5 * (z0 * z0 + z1 * z1))   # (K_pad, TN)
    res = jnp.sum(e, axis=0, keepdims=True)       # (1, TN)  sublane reduce
    o_ref[...] = jnp.sqrt(res)


def gmm_forward(x, mu, sig, norm, *, tile_n=512):
    x = x.astype(jnp.float32)
    mu = mu.astype(jnp.float32)
    sig = sig.astype(jnp.float32)
    norm = norm.astype(jnp.float32)

    N = x.shape[0]
    K = mu.shape[0]
    K_pad = ((K + 7) // 8) * 8  # pad components to a full sublane group

    # ---- Hoisted, tiny (KxK) computation of max_k' log p(mu_k') in plain JAX.
    log2pi = jnp.float32(math.log(2.0 * math.pi))
    logK = jnp.float32(math.log(float(K)))
    zmu = (mu[:, None, :] - mu[None, :, :]) / sig[None, :, :]          # (K, K, 2)
    comp = (-0.5 * jnp.sum(zmu * zmu, axis=-1)
            - jnp.sum(jnp.log(sig), axis=-1)[None, :] - log2pi - logK)  # (K, K)
    lp_mu_max = jnp.max(jax.scipy.special.logsumexp(comp, axis=-1))

    # Fold norm, 1/K, 1/(2*pi*sig0*sig1) and exp(-lp_mu_max) into one weight
    # per component:  res(x) = sum_k w_k * exp(-0.5 * |(x - mu_k)/sig_k|^2)
    w = norm[0] * jnp.exp(
        -(lp_mu_max + logK + log2pi + jnp.log(sig[:, 0]) + jnp.log(sig[:, 1])))

    slab = jnp.zeros((K_pad, 5), jnp.float32)
    slab = slab.at[:K, 0].set(mu[:, 0])
    slab = slab.at[:K, 1].set(mu[:, 1])
    slab = slab.at[:K, 2].set(1.0 / sig[:, 0])
    slab = slab.at[:K, 3].set(1.0 / sig[:, 1])
    slab = slab.at[:K, 4].set(w)

    # Lane-dense input: transpose to (2, N) and pad N to a tile multiple.
    assert tile_n % 128 == 0
    n_blocks = pl.cdiv(N, tile_n)
    N_pad = n_blocks * tile_n
    x_t = jnp.zeros((2, N_pad), jnp.float32).at[:, :N].set(x.T)

    out = pl.pallas_call(
        gmm_kernel,
        out_shape=jax.ShapeDtypeStruct((1, N_pad), jnp.float32),
        grid_spec=pltpu.PrefetchScalarGridSpec(
            num_scalar_prefetch=0,
            grid=(n_blocks,),
            in_specs=[
                pl.BlockSpec((2, tile_n), lambda i: (0, i)),   # x tile (lane-dense)
                pl.BlockSpec((K_pad, 5), lambda i: (0, 0)),    # resident param slab
            ],
            out_specs=pl.BlockSpec((1, tile_n), lambda i: (0, i)),
        ),
        compiler_params=pltpu.CompilerParams(
            dimension_semantics=("parallel",)),
    )(x_t, slab)

    res = out[0, :N]                                   # (N,) already sqrt'ed
    return jnp.broadcast_to(res[:, None], (N, 2))      # (N, 2) expand in XLA


def gmm_ref(x, mu, sig, norm):
    """Plain-JAX reference of the PyTorch forward."""
    K = mu.shape[0]

    def mix_lp(pts):
        z = (pts[:, None, :] - mu[None, :, :]) / sig[None, :, :]        # (M, K, 2)
        comp = (-0.5 * jnp.sum(z * z, axis=-1)
                - jnp.sum(jnp.log(sig), axis=-1)[None, :]
                - jnp.log(2.0 * jnp.pi))                                 # (M, K)
        comp = comp - jnp.log(float(K))
        return jax.scipy.special.logsumexp(comp, axis=-1)                # (M,)

    lp_x = mix_lp(x)
    lp_mu_max = jnp.max(mix_lp(mu))
    res = norm[0] * jnp.exp(lp_x - lp_mu_max)
    return jnp.sqrt(jnp.broadcast_to(res[:, None], (x.shape[0], 2)))


if __name__ == "__main__":
    key = jax.random.PRNGKey(0)
    k_mu, k_sig, k_x = jax.random.split(key, 3)

    # Deterministic parameter init mirroring GMM.__init__
    n_cluster = N_CLUSTER
    init_xy = jnp.array([0.0, 0.0], jnp.float32)
    init_xy_span = jnp.float32(10.0)
    mu = init_xy_span * (0.5 - jax.random.uniform(k_mu, (n_cluster, 2), jnp.float32)) + init_xy
    sig = init_xy_span * jnp.maximum(jax.random.uniform(k_sig, (n_cluster, 2), jnp.float32),
                                     jnp.float32(0.2))
    norm = jnp.array([1.0], jnp.float32)

    # Input: N points in 2D; 4 grid steps of 512 so the parallel axis can
    # shard across both v7x TensorCores.
    N = 2048
    x = init_xy_span * (jax.random.uniform(k_x, (N, 2), jnp.float32) - 0.5)

    out = jax.block_until_ready(gmm_forward(x, mu, sig, norm))

    ref = gmm_ref(x, mu, sig, norm)
    assert out.shape == (N, 2) and out.dtype == jnp.float32
    assert jnp.allclose(out, ref, atol=1e-4, rtol=1e-4)
    print("KERNEL_OK")
</pallas_src>

<mosaic_0001>
module attributes {stable_mosaic.version = 11 : i64} {
  func.func @gmm_kernel(%arg0: i32, %arg1: memref<2x512xf32, #tpu.memory_space<vmem>>, %arg2: memref<24x5xf32, #tpu.memory_space<vmem>>, %arg3: memref<1x512xf32, #tpu.memory_space<vmem>>) attributes {dimension_semantics = [#tpu.dimension_semantics<parallel>], iteration_bounds = array<i64: 4>, scalar_prefetch = 0 : i64, scratch_operands = 0 : i64, tpu.core_type = #tpu.core_type<tc>, window_params = [{transform_indices = @transform_0, window_bounds = array<i64: 2, 512>}, {pipeline_mode = #tpu.pipeline_mode<synchronous>, transform_indices = @transform_1, window_bounds = array<i64: 24, 5>}, {transform_indices = @transform_2, window_bounds = array<i64: 1, 512>}]} {
    %c0 = arith.constant 0 : index
    %c0_0 = arith.constant 0 : index
    %0 = vector.load %arg1[%c0, %c0_0] : memref<2x512xf32, #tpu.memory_space<vmem>>, vector<1x512xf32>
    %c1 = arith.constant 1 : index
    %c0_1 = arith.constant 0 : index
    %1 = vector.load %arg1[%c1, %c0_1] : memref<2x512xf32, #tpu.memory_space<vmem>>, vector<1x512xf32>
    %c0_2 = arith.constant 0 : index
    %c0_3 = arith.constant 0 : index
    %2 = vector.load %arg2[%c0_2, %c0_3] : memref<24x5xf32, #tpu.memory_space<vmem>>, vector<24x1xf32>
    %c0_4 = arith.constant 0 : index
    %c1_5 = arith.constant 1 : index
    %3 = vector.load %arg2[%c0_4, %c1_5] : memref<24x5xf32, #tpu.memory_space<vmem>>, vector<24x1xf32>
    %c0_6 = arith.constant 0 : index
    %c2 = arith.constant 2 : index
    %4 = vector.load %arg2[%c0_6, %c2] : memref<24x5xf32, #tpu.memory_space<vmem>>, vector<24x1xf32>
    %c0_7 = arith.constant 0 : index
    %c3 = arith.constant 3 : index
    %5 = vector.load %arg2[%c0_7, %c3] : memref<24x5xf32, #tpu.memory_space<vmem>>, vector<24x1xf32>
    %c0_8 = arith.constant 0 : index
    %c4 = arith.constant 4 : index
    %6 = vector.load %arg2[%c0_8, %c4] : memref<24x5xf32, #tpu.memory_space<vmem>>, vector<24x1xf32>
    %7 = vector.broadcast %0 : vector<1x512xf32> to vector<24x512xf32>
    %8 = vector.broadcast %2 : vector<24x1xf32> to vector<24x512xf32>
    %9 = arith.subf %7, %8 : vector<24x512xf32>
    %10 = vector.broadcast %4 : vector<24x1xf32> to vector<24x512xf32>
    %11 = arith.mulf %9, %10 : vector<24x512xf32>
    %12 = vector.broadcast %1 : vector<1x512xf32> to vector<24x512xf32>
    %13 = vector.broadcast %3 : vector<24x1xf32> to vector<24x512xf32>
    %14 = arith.subf %12, %13 : vector<24x512xf32>
    %15 = vector.broadcast %5 : vector<24x1xf32> to vector<24x512xf32>
    %16 = arith.mulf %14, %15 : vector<24x512xf32>
    %17 = arith.mulf %11, %11 : vector<24x512xf32>
    %18 = arith.mulf %16, %16 : vector<24x512xf32>
    %19 = arith.addf %17, %18 : vector<24x512xf32>
    %cst = arith.constant -5.000000e-01 : f32
    %20 = vector.broadcast %cst : f32 to vector<24x512xf32>
    %21 = arith.mulf %20, %19 : vector<24x512xf32>
    %22 = math.exp %21 : vector<24x512xf32>
    %23 = vector.broadcast %6 : vector<24x1xf32> to vector<24x512xf32>
    %24 = arith.mulf %23, %22 : vector<24x512xf32>
    %cst_9 = arith.constant dense<0.000000e+00> : vector<512xf32>
    %25 = vector.multi_reduction <add>, %24, %cst_9 [0] : vector<24x512xf32> to vector<512xf32>
    %26 = vector.shape_cast %25 : vector<512xf32> to vector<1x512xf32>
    %27 = math.sqrt %26 : vector<1x512xf32>
    %c0_10 = arith.constant 0 : index
    %c0_11 = arith.constant 0 : index
    %28 = vector.load %arg3[%c0_10, %c0_11] : memref<1x512xf32, #tpu.memory_space<vmem>>, vector<1x512xf32>
    tpu.vector_store %arg3[%c0_10, %c0_11], %27 {strides = array<i32>} : memref<1x512xf32, #tpu.memory_space<vmem>>, vector<1x512xf32>,
    return
  }
  func.func @transform_0(%arg0: i32) -> (i32, i32) {
    %c0_i32 = arith.constant 0 : i32
    %c0_i32_0 = arith.constant 0 : i32
    return %c0_i32, %arg0 : i32, i32
  }
  func.func @transform_1(%arg0: i32) -> (i32, i32) {
    %c0_i32 = arith.constant 0 : i32
    %c0_i32_0 = arith.constant 0 : i32
    %c0_i32_1 = arith.constant 0 : i32
    return %c0_i32, %c0_i32_0 : i32, i32
  }
  func.func @transform_2(%arg0: i32) -> (i32, i32) {
    %c0_i32 = arith.constant 0 : i32
    %c0_i32_0 = arith.constant 0 : i32
    return %c0_i32, %arg0 : i32, i32
  }
}

</mosaic_0001>

<llo_original>
// kernel: tpu_custom_call.1
$region0: #{tpu_custom_call.1}
  #allocation0 [shape = 'u32[]', space=smem, size = 0x4, offset = 0x4, fixed_abs, tag = 'smem constant byte address 0x4 - core index']
  #allocation1 [shape = 'u32[72,128]{1,0:T(1,128)}', space=vmem, size = 0x9000, scoped, tag = 'internal scratch']
  %s0 = inlined_call_operand.vmem [shape: f32[2,2048], index: 0, kind: input, shape index: {}]
  %s1 = inlined_call_operand.vmem [shape: f32[24,5], index: 1, kind: input, shape index: {}]
  %s2 = inlined_call_operand.hbm [shape: f32[1,2048], index: 2, kind: output, shape index: {}]
  %s3 = sld [smem:[#allocation0]]
  $region41: #{tpu_custom_call.1} parent=0
    _
  %s5 = ssub.s32 1, %s3
  %s6 = scalar_select 0, %s5, %s3
  $region1: #{tpu_custom_call.1} parent=0
    #allocation2 [shape = 'u8[4096]{0}', space=vmem, size = 0x1000, scoped, tag = 'output window, operand 0']
    #allocation3 [shape = 's32[2]{0}', space=sflag, size = 0x8, scoped, tag = 'scoped memory for tpu_custom_call.1']
    %7 = vsyncpa [#allocation3], 0
    %s8 = scalar_lea.sflag [#allocation3], 1
    %9 = vsyncpa %s8, 0
    loop: start=0, step=1, limit=6
    $region2: #{tpu_custom_call.1} parent=1 // loop_pre_header
      _
    $region3: #{tpu_custom_call.1} parent=1 // loop_header
      %s11 = sphi 0, %s15
      %p12 = scmp.ge.s32.totalorder %s11, 6
      %s21 = sphi 0, %s23
      %s24 = sphi 0, %s21
      %s25 = sphi 0, %s24
      %s41 = sphi 0, %s25
      %s45 = sphi 0, %s45
      %s47 = sphi 0, %s45
      %s48 = sphi 0, %s47
      %s62 = sphi 0, %s48
      %s68 = sphi 0, %s70
      %s71 = sphi 0, %s68
      %s72 = sphi 0, %s71
      %s88 = sphi 0, %s72
    $region4: #{tpu_custom_call.1} parent=1 // loop_header_branch
      %14 = sbr.rel (%p12) target = $region8
    $region5: #{tpu_custom_call.1} parent=1 // loop_body
      %s16 = ssub.s32 %s11, 1
      %s17 = ssub.s32 %s11, 2
      %s18 = sadd.s32 %s11, 1
      %s19 = ssub.s32 %s11, %s18
      %p20 = scmp.eq.s32.totalorder %s19, 0
      %s22 = sadd.s32 %s21, 1
      %s23 = scalar_select %p20, %s21, %s22
      %p26 = pneg %p20
      %p27 = scmp.eq.s32.totalorder %s11, 3
      %p28 = por %p26, %p27
      %p29 = scmp.ne.s32.totalorder %s21, %s24
      %p30 = scmp.eq.s32.totalorder %s11, 0
      %p31 = por %p29, %p30
      %p32 = scmp.ne.s32.totalorder %s21, %s24
      %p33 = scmp.eq.s32.totalorder %s16, 3
      %p34 = por %p32, %p33
      %p35 = scmp.ne.s32.totalorder %s24, %s25
      %p36 = scmp.eq.s32.totalorder %s16, 0
      %p37 = por %p35, %p36
      %p38 = scmp.ne.s32.totalorder %s24, %s25
      %p39 = scmp.eq.s32.totalorder %s17, 3
      %p40 = por %p38, %p39
      %p42 = scmp.ne.s32.totalorder %s25, %s41
      %p43 = scmp.eq.s32.totalorder %s17, 0
      %p44 = por %p42, %p43
      %s46 = sadd.s32 %s45, 1
      %p49 = scmp.eq.s32.totalorder %s11, 3
      %p50 = scmp.ne.s32.totalorder %s45, %s47
      %p51 = scmp.eq.s32.totalorder %s11, 0
      %p52 = por %p50, %p51
      %p53 = scmp.ne.s32.totalorder %s45, %s47
      %p54 = scmp.eq.s32.totalorder %s16, 3
      %p55 = por %p53, %p54
      %p56 = scmp.ne.s32.totalorder %s47, %s48
      %p57 = scmp.eq.s32.totalorder %s16, 0
      %p58 = por %p56, %p57
      %p59 = scmp.ne.s32.totalorder %s47, %s48
      %p60 = scmp.eq.s32.totalorder %s17, 3
      %p61 = por %p59, %p60
      %p63 = scmp.ne.s32.totalorder %s48, %s62
      %p64 = scmp.eq.s32.totalorder %s17, 0
      %p65 = por %p63, %p64
      %s66 = ssub.s32 %s11, %s18
      %p67 = scmp.eq.s32.totalorder %s66, 0
      %s69 = sadd.s32 %s68, 1
      %s70 = scalar_select %p67, %s68, %s69
      %p73 = pneg %p67
      %p74 = scmp.eq.s32.totalorder %s11, 3
      %p75 = por %p73, %p74
      %p76 = scmp.ne.s32.totalorder %s68, %s71
      %p77 = scmp.eq.s32.totalorder %s11, 0
      %p78 = por %p76, %p77
      %p79 = scmp.ne.s32.totalorder %s68, %s71
      %p80 = scmp.eq.s32.totalorder %s16, 3
      %p81 = por %p79, %p80
      %p82 = scmp.ne.s32.totalorder %s71, %s72
      %p83 = scmp.eq.s32.totalorder %s16, 0
      %p84 = por %p82, %p83
      %p85 = scmp.ne.s32.totalorder %s71, %s72
      %p86 = scmp.eq.s32.totalorder %s17, 3
      %p87 = por %p85, %p86
      %p89 = scmp.ne.s32.totalorder %s72, %s88
      %p90 = scmp.eq.s32.totalorder %s17, 0
      %p91 = por %p89, %p90
      %p92 = scmp.le.s32.totalorder 1, %s11
      %p93 = scmp.lt.s32.totalorder %s11, 5
      %p94 = pnand %p92, %p93
      %p95 = pneg %p94
      // Predicated region
      $region9: #{tpu_custom_call.1} parent=5 // pred_check
        _
      $region10: #{tpu_custom_call.1} parent=5 // pred_check_branch
        %97 = sbr.rel (%p94) target = $region12
      $region11: #{tpu_custom_call.1} parent=5 // pred_region
        %s98 = ssub.s32 %s11, 1
        // Predicated region
        $region13: #{tpu_custom_call.1} parent=11 // pred_check
          %p99 = pneg %p58
        $region14: #{tpu_custom_call.1} parent=11 // pred_check_branch
          %101 = sbr.rel (%p99) target = $region16
        $region15: #{tpu_custom_call.1} parent=11 // pred_region
          _
        $region16: #{tpu_custom_call.1} parent=11 // pred_fallthru
          _
      $region12: #{tpu_custom_call.1} parent=5 // pred_fallthru
        _
      %p102 = scmp.lt.s32.totalorder %s11, 4
      // Predicated region
      $region17: #{tpu_custom_call.1} parent=5 // pred_check
        %p103 = pneg %p102
      $region18: #{tpu_custom_call.1} parent=5 // pred_check_branch
        %105 = sbr.rel (%p103) target = $region20
      $region19: #{tpu_custom_call.1} parent=5 // pred_region
        // Predicated region
        $region21: #{tpu_custom_call.1} parent=19 // pred_check
          %p106 = pneg %p31
        $region22: #{tpu_custom_call.1} parent=19 // pred_check_branch
          %108 = sbr.rel (%p106) target = $region24
        $region23: #{tpu_custom_call.1} parent=19 // pred_region
          %s109 = smul.u32 4, %s11
          %p110 = scmp.lt.s32.totalorder %s109, 15
          %s111 = scalar_select %p110, %s109, 15
          %s112 = smul.addr %s111, 2
          %s113 = scalar_lea.vmem %s0, %s112
          %s114 = smul.u32 4, %s11
        $region24: #{tpu_custom_call.1} parent=19 // pred_fallthru
          _
      $region20: #{tpu_custom_call.1} parent=5 // pred_fallthru
        _
      %p115 = scmp.le.s32.totalorder 1, %s11
      %p116 = scmp.lt.s32.totalorder %s11, 5
      %p117 = pnand %p115, %p116
      %p118 = pneg %p117
      // Predicated region
      $region25: #{tpu_custom_call.1} parent=5 // pred_check
        _
      $region26: #{tpu_custom_call.1} parent=5 // pred_check_branch
        %120 = sbr.rel (%p117) target = $region28
      $region27: #{tpu_custom_call.1} parent=5 // pred_region
        %s121 = ssub.s32 %s11, 1
        %s122 = smul.u32 4, %s16
        %p123 = scmp.lt.s32.totalorder %s122, 15
        %s124 = scalar_select %p123, %s122, 15
        %s125 = smul.addr %s124, 2
        %s126 = scalar_lea.vmem %s0, %s125
        %p127 = pneg %p37
        %p128 = pneg %p34
        %p129 = pneg %p58
        %p130 = pneg %p55
        %p131 = pneg %p84
        %p132 = pneg %p81
        %s133 = sand.u32 %s71, 1
        %s134 = scalar_lea.sflag [#allocation3], %s133
        %s135 = sand.u32 %s71, 1
        %s136 = smul.addr %s135, 4
        %s137 = scalar_lea.vmem [#allocation2], %s136
        %s138 = smul.u32 4, %s16
        %p139 = scmp.lt.s32.totalorder %s138, 15
        %s140 = scalar_select %p139, %s138, 15
        %s141 = smul.addr %s140, 2
        %s142 = scalar_lea.vmem %s0, %s141
        %s143 = smul.u32 4, %s16
        %s144 = smul.u32 4, %s16
        %v145 = vld [vmem:[%s142] ss:$2 sm:$0xf]
        %s146 = scalar_lea.vmem %s142, 1
        %v147 = vld [vmem:[%s146] ss:$2 sm:$0xf]
        %v148 = vld [vmem:[%s1] sm:$0xff]
        %v149 = vld [vmem:[%s1 + $0x8] sm:$0xff]
        %v150 = vld [vmem:[%s1 + $0x10] sm:$0xff]
        %v152 = vperm.slane %v145, 0
        %v153 = vperm.slane %v145, 1
        %v154 = vperm.slane %v145, 2
        %v155 = vperm.slane %v145, 3
        %161 = vset.pattern.permute.xlu0 0
        %162 = vperm.xlu0 %161, %v148
        %v163 = vpop.permute.xlu0 %162
        %166 = vset.pattern.permute.xlu0 0
        %167 = vperm.xlu0 %166, %v149
        %v168 = vpop.permute.xlu0 %167
        %171 = vset.pattern.permute.xlu0 0
        %172 = vperm.xlu0 %171, %v150
        %v173 = vpop.permute.xlu0 %172
        %v175 = vsub.f32 %v152, %v163
        %v176 = vsub.f32 %v153, %v163
        %v177 = vsub.f32 %v154, %v163
        %v178 = vsub.f32 %v155, %v163
        %v179 = vsub.f32 %v152, %v168
        %v180 = vsub.f32 %v153, %v168
        %v181 = vsub.f32 %v154, %v168
        %v182 = vsub.f32 %v155, %v168
        %v183 = vsub.f32 %v152, %v173
        %v184 = vsub.f32 %v153, %v173
        %v185 = vsub.f32 %v154, %v173
        %v186 = vsub.f32 %v155, %v173
        %187 = vset.pattern.permute.xlu0 2
        %188 = vperm.xlu0 %187, %v148
        %v189 = vpop.permute.xlu0 %188
        %191 = vset.pattern.permute.xlu0 2
        %192 = vperm.xlu0 %191, %v149
        %v193 = vpop.permute.xlu0 %192
        %195 = vset.pattern.permute.xlu0 2
        %196 = vperm.xlu0 %195, %v150
        %v197 = vpop.permute.xlu0 %196
        %v199 = vmul.f32 %v175, %v189
        %v200 = vmul.f32 %v176, %v189
        %v201 = vmul.f32 %v177, %v189
        %v202 = vmul.f32 %v178, %v189
        %v203 = vmul.f32 %v179, %v193
        %v204 = vmul.f32 %v180, %v193
        %v205 = vmul.f32 %v181, %v193
        %v206 = vmul.f32 %v182, %v193
        %v207 = vmul.f32 %v183, %v197
        %v208 = vmul.f32 %v184, %v197
        %v209 = vmul.f32 %v185, %v197
        %v210 = vmul.f32 %v186, %v197
        %v212 = vperm.slane %v147, 0
        %v213 = vperm.slane %v147, 1
        %v214 = vperm.slane %v147, 2
        %v215 = vperm.slane %v147, 3
        %220 = vset.pattern.permute.xlu0 1
        %221 = vperm.xlu0 %220, %v148
        %v222 = vpop.permute.xlu0 %221
        %224 = vset.pattern.permute.xlu0 1
        %225 = vperm.xlu0 %224, %v149
        %v226 = vpop.permute.xlu0 %225
        %228 = vset.pattern.permute.xlu0 1
        %229 = vperm.xlu0 %228, %v150
        %v230 = vpop.permute.xlu0 %229
        %v232 = vsub.f32 %v212, %v222
        %v233 = vsub.f32 %v213, %v222
        %v234 = vsub.f32 %v214, %v222
        %v235 = vsub.f32 %v215, %v222
        %v236 = vsub.f32 %v212, %v226
        %v237 = vsub.f32 %v213, %v226
        %v238 = vsub.f32 %v214, %v226
        %v239 = vsub.f32 %v215, %v226
        %v240 = vsub.f32 %v212, %v230
        %v241 = vsub.f32 %v213, %v230
        %v242 = vsub.f32 %v214, %v230
        %v243 = vsub.f32 %v215, %v230
        %244 = vset.pattern.permute.xlu0 3
        %245 = vperm.xlu0 %244, %v148
        %v246 = vpop.permute.xlu0 %245
        %248 = vset.pattern.permute.xlu0 3
        %249 = vperm.xlu0 %248, %v149
        %v250 = vpop.permute.xlu0 %249
        %252 = vset.pattern.permute.xlu0 3
        %253 = vperm.xlu0 %252, %v150
        %v254 = vpop.permute.xlu0 %253
        %v256 = vmul.f32 %v232, %v246
        %v257 = vmul.f32 %v233, %v246
        %v258 = vmul.f32 %v234, %v246
        %v259 = vmul.f32 %v235, %v246
        %v260 = vmul.f32 %v236, %v250
        %v261 = vmul.f32 %v237, %v250
        %v262 = vmul.f32 %v238, %v250
        %v263 = vmul.f32 %v239, %v250
        %v264 = vmul.f32 %v240, %v254
        %v265 = vmul.f32 %v241, %v254
        %v266 = vmul.f32 %v242, %v254
        %v267 = vmul.f32 %v243, %v254
        %v268 = vmul.f32 %v199, %v199
        %v269 = vmul.f32 %v200, %v200
        %v270 = vmul.f32 %v201, %v201
        %v271 = vmul.f32 %v202, %v202
        %v272 = vmul.f32 %v203, %v203
        %v273 = vmul.f32 %v204, %v204
        %v274 = vmul.f32 %v205, %v205
        %v275 = vmul.f32 %v206, %v206
        %v276 = vmul.f32 %v207, %v207
        %v277 = vmul.f32 %v208, %v208
        %v278 = vmul.f32 %v209, %v209
        %v279 = vmul.f32 %v210, %v210
        %v280 = vmul.f32 %v256, %v256
        %v281 = vmul.f32 %v257, %v257
        %v282 = vmul.f32 %v258, %v258
        %v283 = vmul.f32 %v259, %v259
        %v284 = vmul.f32 %v260, %v260
        %v285 = vmul.f32 %v261, %v261
        %v286 = vmul.f32 %v262, %v262
        %v287 = vmul.f32 %v263, %v263
        %v288 = vmul.f32 %v264, %v264
        %v289 = vmul.f32 %v265, %v265
        %v290 = vmul.f32 %v266, %v266
        %v291 = vmul.f32 %v267, %v267
        %v292 = vadd.f32 %v268, %v280
        %v293 = vadd.f32 %v269, %v281
        %v294 = vadd.f32 %v270, %v282
        %v295 = vadd.f32 %v271, %v283
        %v296 = vadd.f32 %v272, %v284
        %v297 = vadd.f32 %v273, %v285
        %v298 = vadd.f32 %v274, %v286
        %v299 = vadd.f32 %v275, %v287
        %v300 = vadd.f32 %v276, %v288
        %v301 = vadd.f32 %v277, %v289
        %v302 = vadd.f32 %v278, %v290
        %v303 = vadd.f32 %v279, %v291
        %v304 = vmul.f32 %v292, -0.5
        %v305 = vmul.f32 %v293, -0.5
        %v306 = vmul.f32 %v294, -0.5
        %v307 = vmul.f32 %v295, -0.5
        %v308 = vmul.f32 %v296, -0.5
        %v309 = vmul.f32 %v297, -0.5
        %v310 = vmul.f32 %v298, -0.5
        %v311 = vmul.f32 %v299, -0.5
        %v312 = vmul.f32 %v300, -0.5
        %v313 = vmul.f32 %v301, -0.5
        %v314 = vmul.f32 %v302, -0.5
        %v315 = vmul.f32 %v303, -0.5
        %v316 = vmul.f32 %v304, 1.442695
        %v317 = vpow.pop %v316
        %v318 = vmul.f32 %v305, 1.442695
        %v319 = vpow.pop %v318
        %v320 = vmul.f32 %v306, 1.442695
        %v321 = vpow.pop %v320
        %v322 = vmul.f32 %v307, 1.442695
        %v323 = vpow.pop %v322
        %v324 = vmul.f32 %v308, 1.442695
        %v325 = vpow.pop %v324
        %v326 = vmul.f32 %v309, 1.442695
        %v327 = vpow.pop %v326
        %v328 = vmul.f32 %v310, 1.442695
        %v329 = vpow.pop %v328
        %v330 = vmul.f32 %v311, 1.442695
        %v331 = vpow.pop %v330
        %v332 = vmul.f32 %v312, 1.442695
        %v333 = vpow.pop %v332
        %v334 = vmul.f32 %v313, 1.442695
        %v335 = vpow.pop %v334
        %v336 = vmul.f32 %v314, 1.442695
        %v337 = vpow.pop %v336
        %v338 = vmul.f32 %v315, 1.442695
        %v339 = vpow.pop %v338
        %340 = vset.pattern.permute.xlu0 4
        %341 = vperm.xlu0 %340, %v148
        %v342 = vpop.permute.xlu0 %341
        %344 = vset.pattern.permute.xlu0 4
        %345 = vperm.xlu0 %344, %v149
        %v346 = vpop.permute.xlu0 %345
        %348 = vset.pattern.permute.xlu0 4
        %349 = vperm.xlu0 %348, %v150
        %v350 = vpop.permute.xlu0 %349
        %v352 = vmul.f32 %v342, %v317
        %v353 = vmul.f32 %v342, %v319
        %v354 = vmul.f32 %v342, %v321
        %v355 = vmul.f32 %v342, %v323
        %v356 = vmul.f32 %v346, %v325
        %v357 = vmul.f32 %v346, %v327
        %v358 = vmul.f32 %v346, %v329
        %v359 = vmul.f32 %v346, %v331
        %v360 = vmul.f32 %v350, %v333
        %v361 = vmul.f32 %v350, %v335
        %v362 = vmul.f32 %v350, %v337
        %v363 = vmul.f32 %v350, %v339
        %v364 = vadd.f32 %v352, %v356
        %v365 = vadd.f32 %v364, %v360
        %v366 = vrot.slane %v365, 4
        %v367 = vadd.f32 %v365, %v366
        %v368 = vrot.slane %v367, 2
        %v369 = vadd.f32 %v367, %v368
        %v370 = vrot.slane %v369, 1
        %v371 = vadd.f32 %v369, %v370
        %v372 = vadd.f32 %v353, %v357
        %v373 = vadd.f32 %v372, %v361
        %v374 = vrot.slane %v373, 4
        %v375 = vadd.f32 %v373, %v374
        %v376 = vrot.slane %v375, 2
        %v377 = vadd.f32 %v375, %v376
        %v378 = vrot.slane %v377, 1
        %v379 = vadd.f32 %v377, %v378
        %v380 = vadd.f32 %v354, %v358
        %v381 = vadd.f32 %v380, %v362
        %v382 = vrot.slane %v381, 4
        %v383 = vadd.f32 %v381, %v382
        %v384 = vrot.slane %v383, 2
        %v385 = vadd.f32 %v383, %v384
        %v386 = vrot.slane %v385, 1
        %v387 = vadd.f32 %v385, %v386
        %v388 = vadd.f32 %v355, %v359
        %v389 = vadd.f32 %v388, %v363
        %v390 = vrot.slane %v389, 4
        %v391 = vadd.f32 %v389, %v390
        %v392 = vrot.slane %v391, 2
        %v393 = vadd.f32 %v391, %v392
        %v394 = vrot.slane %v393, 1
        %v395 = vadd.f32 %v393, %v394
        %v396 = vrsqrt.pop %v371
        %v397 = vmul.f32 %v396, %v371
        %v398 = vmul.f32 %v397, %v396
        %v399 = vmul.f32 0.5, %v398
        %v400 = vsub.f32 1.5, %v399
        %v401 = vmul.f32 %v396, %v400
        %v402 = vmul.f32 %v371, %v401
        %vm403 = vcmp.eq.f32.partialorder %v371, inf
        %v404 = vsel %vm403, %v371, %v402
        %vm405 = vcmp.eq.f32.partialorder %v371, 0.0
        %v406 = vand.u32 %v371, 2147483648
        %v407 = vsel %vm405, %v406, %v404
        %v408 = vrsqrt.pop %v379
        %v409 = vmul.f32 %v408, %v379
        %v410 = vmul.f32 %v409, %v408
        %v411 = vmul.f32 0.5, %v410
        %v412 = vsub.f32 1.5, %v411
        %v413 = vmul.f32 %v408, %v412
        %v414 = vmul.f32 %v379, %v413
        %vm415 = vcmp.eq.f32.partialorder %v379, inf
        %v416 = vsel %vm415, %v379, %v414
        %vm417 = vcmp.eq.f32.partialorder %v379, 0.0
        %v418 = vand.u32 %v379, 2147483648
        %v419 = vsel %vm417, %v418, %v416
        %v420 = vrsqrt.pop %v387
        %v421 = vmul.f32 %v420, %v387
        %v422 = vmul.f32 %v421, %v420
        %v423 = vmul.f32 0.5, %v422
        %v424 = vsub.f32 1.5, %v423
        %v425 = vmul.f32 %v420, %v424
        %v426 = vmul.f32 %v387, %v425
        %vm427 = vcmp.eq.f32.partialorder %v387, inf
        %v428 = vsel %vm427, %v387, %v426
        %vm429 = vcmp.eq.f32.partialorder %v387, 0.0
        %v430 = vand.u32 %v387, 2147483648
        %v431 = vsel %vm429, %v430, %v428
        %v432 = vrsqrt.pop %v395
        %v433 = vmul.f32 %v432, %v395
        %v434 = vmul.f32 %v433, %v432
        %v435 = vmul.f32 0.5, %v434
        %v436 = vsub.f32 1.5, %v435
        %v437 = vmul.f32 %v432, %v436
        %v438 = vmul.f32 %v395, %v437
        %vm439 = vcmp.eq.f32.partialorder %v395, inf
        %v440 = vsel %vm439, %v395, %v438
        %vm441 = vcmp.eq.f32.partialorder %v395, 0.0
        %v442 = vand.u32 %v395, 2147483648
        %v443 = vsel %vm441, %v442, %v440
        %v448 = vrot.slane %v419, 7
        %v449 = vrot.slane %v431, 6
        %v450 = vrot.slane %v443, 5
        %vm451 = vcmask 1040384
        %v452 = vsel %vm451, %v407, %v448
        %vm453 = vcmask 1042434
        %v454 = vsel %vm453, %v449, %v450
        %vm455 = vcmask 1041408
        %v456 = vsel %vm455, %v452, %v454
        %v458 = vlaneseq
        %vm459 = vcmp.ge.s32.totalorder %v458, 0
        %vm460 = vcmp.lt.s32.totalorder %v458, 512
        %vm461 = vmand %vm459, %vm460
        %462 = vst.msk [vmem:[%s137] sm:$0xf] %vm461, %v456
        %s463 = sand.u32 %s71, 1
        %s464 = scalar_lea.sflag [#allocation3], %s463
        %s465 = sand.u32 %s71, 1
        %s466 = smul.addr %s465, 4
        %s467 = scalar_lea.vmem [#allocation2], %s466
        // Predicated region
        $region29: #{tpu_custom_call.1} parent=27 // pred_check
          %p468 = pneg %p81
        $region30: #{tpu_custom_call.1} parent=27 // pred_check_branch
          %470 = sbr.rel (%p468) target = $region32
        $region31: #{tpu_custom_call.1} parent=27 // pred_region
          %s471 = smul.u32 4, %s16
          %473 = vsyncadd %s464, 0
          %s474 = scalar_lea.hbm %s2, %s471
          %s476 = sshll.u32 %s467, 4
          %s477 = int_to_ptr.vmem [resolvable:$true] %s476
          %s478 = sshll.u32 %s474, 4
          %s479 = int_to_ptr.hbm [resolvable:$true] %s478
          %481 = dma.vmem_to_hbm [thread:$0]  %s477, 64, %s479, %s464
        $region32: #{tpu_custom_call.1} parent=27 // pred_fallthru
          _
      $region28: #{tpu_custom_call.1} parent=5 // pred_fallthru
        _
      %p482 = scmp.le.s32.totalorder 2, %s11
      // Predicated region
      $region33: #{tpu_custom_call.1} parent=5 // pred_check
        %p483 = pneg %p482
      $region34: #{tpu_custom_call.1} parent=5 // pred_check_branch
        %485 = sbr.rel (%p483) target = $region36
      $region35: #{tpu_custom_call.1} parent=5 // pred_region
        %s486 = ssub.s32 %s11, 2
        // Predicated region
        $region37: #{tpu_custom_call.1} parent=35 // pred_check
          %p487 = pneg %p87
        $region38: #{tpu_custom_call.1} parent=35 // pred_check_branch
          %489 = sbr.rel (%p487) target = $region40
        $region39: #{tpu_custom_call.1} parent=35 // pred_region
          %s490 = sand.u32 %s72, 1
          %s491 = scalar_lea.sflag [#allocation3], %s490
          %s492 = sand.u32 %s72, 1
          %s493 = smul.addr %s492, 4
          %s494 = scalar_lea.vmem [#allocation2], %s493
          %496 = dma.done %s491, 64
        $region40: #{tpu_custom_call.1} parent=35 // pred_fallthru
          _
      $region36: #{tpu_custom_call.1} parent=5 // pred_fallthru
        _
    $region6: #{tpu_custom_call.1} parent=1 // loop_footer
      %s15 = sadd.s32 1, %s11
    $region7: #{tpu_custom_call.1} parent=1 // loop_footer_branch
      %10 = sbr.rel target = $region3
    $region8: #{tpu_custom_call.1} parent=1 // loop_exit
      _
    %497 = vsyncpa [#allocation3], 1
    %s498 = scalar_lea.sflag [#allocation3], 1
    %499 = vsyncpa %s498, 1

</llo_original>
